<compile_context>
chip_gen: v5e
topology: v5e:2x2
jax: 0.10.0
libtpu: 0.0.40
codegen_flags: <defaults>
</compile_context>

<pallas_src>
import functools

import jax
import jax.numpy as jnp
from jax.experimental import pallas as pl
from jax.experimental.pallas import tpu as pltpu


def _round_up(x, m):
    return (x + m - 1) // m * m


def _ngram_fused_kernel(idx_ref, ew1_ref, b1_ref, w2_ref, b2_ref, o_ref):
    # idx_ref : (TB, ctx)       int32 token indices for this batch tile
    # ew1_ref : (ctx, Vp, H)    bf16 fused (embedding @ W1_slot) tables
    # b1_ref  : (1, H)          f32
    # w2_ref  : (H, Vp)         bf16 second Linear weight (transposed vs. torch)
    # b2_ref  : (1, Vp)         f32
    # o_ref   : (TB, Vp)        f32 logits
    tb, v_pad = o_ref.shape
    ctx = idx_ref.shape[1]
    hidden = ew1_ref.shape[2]

    idx = idx_ref[...]                                                   # (TB, ctx)
    vocab_iota = jax.lax.broadcasted_iota(jnp.int32, (tb, v_pad), 1)     # (TB, Vp)

    # Embedding lookup is linear, so  emb_flat @ W1 == sum_c onehot_c @ EW1[c].
    acc = jnp.zeros((tb, hidden), jnp.float32)
    for c in range(ctx):                                                 # ctx is static
        onehot = (idx[:, c:c + 1] == vocab_iota).astype(jnp.bfloat16)    # (TB, Vp)
        acc = acc + jnp.dot(onehot, ew1_ref[c],
                            preferred_element_type=jnp.float32)          # (TB, H) f32

    h = jnp.maximum(acc + b1_ref[...], 0.0)                              # ReLU, f32 epilogue

    out = jnp.dot(h.astype(jnp.bfloat16), w2_ref[...],
                  preferred_element_type=jnp.float32) + b2_ref[...]
    o_ref[...] = out.astype(o_ref.dtype)


def prepare_ngram_params(emb_table, w1, b1, w2, b2):
    """One-time weight packing (hoisted out of the per-call path).

    emb_table : (vocab, n_dim) f32
    w1        : (ctx*n_dim, 128) f32   (transposed vs. torch Linear)
    b1        : (128,) f32
    w2        : (128, vocab) f32       (transposed vs. torch Linear)
    b2        : (vocab,) f32
    """
    vocab, n_dim = emb_table.shape
    k_in, hidden = w1.shape
    ctx = k_in // n_dim
    assert ctx * n_dim == k_in
    v_pad = _round_up(vocab, 128)

    # Fold the embedding into Linear1 (exact: the lookup is linear).
    w1_slots = w1.reshape(ctx, n_dim, hidden)
    ew1 = jnp.einsum('vd,cdh->cvh', emb_table, w1_slots)                 # (ctx, V, H) f32
    ew1 = (jnp.zeros((ctx, v_pad, hidden), jnp.float32)
           .at[:, :vocab, :].set(ew1)).astype(jnp.bfloat16)

    w2p = (jnp.zeros((hidden, v_pad), jnp.float32)
           .at[:, :vocab].set(w2)).astype(jnp.bfloat16)
    b1p = b1.reshape(1, hidden).astype(jnp.float32)
    b2p = (jnp.zeros((1, v_pad), jnp.float32)
           .at[:, :vocab].set(b2.reshape(1, vocab)))
    return ew1, b1p, w2p, b2p


@functools.partial(jax.jit, static_argnames=("vocab",))
def ngram_forward_packed(x_idx, ew1, b1, w2, b2, *, vocab):
    """Runs the fused forward. Returns (B, vocab) f32 logits."""
    B, ctx = x_idx.shape
    _, v_pad, hidden = ew1.shape

    # Adaptive batch tile: pad to the 16-row bf16 sublane pack, cap at 128,
    # and prefer >= 2 grid steps (megacore sharding on v7x) when B allows.
    bp = _round_up(B, 16)
    tb = min(128, bp)
    if bp >= 32 and bp // tb < 2:
        tb = max(16, _round_up(bp // 2, 16))
    b_pad = _round_up(B, tb)

    idx_pad = jnp.zeros((b_pad, ctx), jnp.int32).at[:B].set(x_idx.astype(jnp.int32))

    flops = 2 * b_pad * (ctx * v_pad * hidden + hidden * v_pad)
    bytes_accessed = (idx_pad.size * 4 + ew1.size * 2 + b1.size * 4
                      + w2.size * 2 + b2.size * 4 + b_pad * v_pad * 4)

    out = pl.pallas_call(
        _ngram_fused_kernel,
        out_shape=jax.ShapeDtypeStruct((b_pad, v_pad), jnp.float32),
        grid_spec=pltpu.PrefetchScalarGridSpec(
            num_scalar_prefetch=0,
            grid=(b_pad // tb,),
            in_specs=[
                pl.BlockSpec((tb, ctx), lambda i: (i, 0)),                # token indices
                pl.BlockSpec((ctx, v_pad, hidden), lambda i: (0, 0, 0)),  # EW1 tables
                pl.BlockSpec((1, hidden), lambda i: (0, 0)),              # b1
                pl.BlockSpec((hidden, v_pad), lambda i: (0, 0)),          # W2
                pl.BlockSpec((1, v_pad), lambda i: (0, 0)),               # b2
            ],
            out_specs=pl.BlockSpec((tb, v_pad), lambda i: (i, 0)),
        ),
        # Batch tiles are independent -> shard across TensorCores on v7x.
        compiler_params=pltpu.CompilerParams(dimension_semantics=("parallel",)),
        cost_estimate=pl.CostEstimate(flops=flops, transcendentals=0,
                                      bytes_accessed=bytes_accessed),
    )(idx_pad, ew1, b1, w2, b2)
    return out[:B, :vocab]


def ngram_forward(x_idx, emb_table, w1, b1, w2, b2):
    """Convenience wrapper: pack weights then run (packing should be cached)."""
    ew1, b1p, w2p, b2p = prepare_ngram_params(emb_table, w1, b1, w2, b2)
    return ngram_forward_packed(x_idx, ew1, b1p, w2p, b2p, vocab=emb_table.shape[0])


if __name__ == "__main__":
    # Module hyper-params (small, consistent with the forward's shapes)
    vocab_size = 256
    context_size = 2
    n_dim = 32
    hidden = 128            # fixed by nn.Linear(context_size * n_dim, 128)
    batch = 8

    key = jax.random.PRNGKey(0)
    k_emb, k_w1, k_b1, k_w2, k_b2, k_x = jax.random.split(key, 6)

    emb_table = jax.random.normal(k_emb, (vocab_size, n_dim), jnp.float32) * 0.1
    w1 = jax.random.normal(k_w1, (context_size * n_dim, hidden), jnp.float32) * 0.05
    b1 = jax.random.normal(k_b1, (hidden,), jnp.float32) * 0.05
    w2 = jax.random.normal(k_w2, (hidden, vocab_size), jnp.float32) * 0.05
    b2 = jax.random.normal(k_b2, (vocab_size,), jnp.float32) * 0.05

    x_idx = jax.random.randint(k_x, (batch, context_size), 0, vocab_size, jnp.int32)

    # One-time weight packing, then the jitted fused forward.
    packed = prepare_ngram_params(emb_table, w1, b1, w2, b2)
    out = jax.block_until_ready(
        ngram_forward_packed(x_idx, *packed, vocab=vocab_size))

    # Pure-JAX f32 reference of the same math (kernel uses bf16 matmuls, so the
    # tolerance is relaxed accordingly).
    emb_flat = jnp.take(emb_table, x_idx, axis=0).reshape(batch, -1)
    ref = jnp.maximum(emb_flat @ w1 + b1, 0.0) @ w2 + b2
    assert out.shape == (batch, vocab_size)
    assert jnp.allclose(out, ref, atol=1e-2, rtol=1e-2), \
        float(jnp.max(jnp.abs(out - ref)))

    print("KERNEL_OK")
</pallas_src>

<mosaic_0001>
module attributes {stable_mosaic.version = 11 : i64} {
  func.func @_ngram_fused_kernel(%arg0: i32, %arg1: memref<16x2xi32, #tpu.memory_space<vmem>>, %arg2: memref<2x256x128xbf16, #tpu.memory_space<vmem>>, %arg3: memref<1x128xf32, #tpu.memory_space<vmem>>, %arg4: memref<128x256xbf16, #tpu.memory_space<vmem>>, %arg5: memref<1x256xf32, #tpu.memory_space<vmem>>, %arg6: memref<16x256xf32, #tpu.memory_space<vmem>>) attributes {dimension_semantics = [#tpu.dimension_semantics<parallel>], iteration_bounds = array<i64: 1>, scalar_prefetch = 0 : i64, scratch_operands = 0 : i64, tpu.core_type = #tpu.core_type<tc>, window_params = [{transform_indices = @transform_0, window_bounds = array<i64: 16, 2>}, {pipeline_mode = #tpu.pipeline_mode<synchronous>, transform_indices = @transform_1, window_bounds = array<i64: 2, 256, 128>}, {pipeline_mode = #tpu.pipeline_mode<synchronous>, transform_indices = @transform_2, window_bounds = array<i64: 1, 128>}, {pipeline_mode = #tpu.pipeline_mode<synchronous>, transform_indices = @transform_3, window_bounds = array<i64: 128, 256>}, {pipeline_mode = #tpu.pipeline_mode<synchronous>, transform_indices = @transform_4, window_bounds = array<i64: 1, 256>}, {transform_indices = @transform_5, window_bounds = array<i64: 16, 256>}]} {
    %c0 = arith.constant 0 : index
    %c0_0 = arith.constant 0 : index
    %0 = vector.load %arg1[%c0, %c0_0] : memref<16x2xi32, #tpu.memory_space<vmem>>, vector<16x2xi32>
    %1 = tpu.iota {dimensions = array<i32: 1>} : vector<16x256xi32>
    %cst = arith.constant 0.000000e+00 : f32
    %2 = vector.broadcast %cst : f32 to vector<16x128xf32>
    %3 = vector.extract_strided_slice %0 {offsets = [0, 0], sizes = [16, 1], strides = [1, 1]} : vector<16x2xi32> to vector<16x1xi32>
    %4 = vector.broadcast %3 : vector<16x1xi32> to vector<16x256xi32>
    %5 = arith.cmpi eq, %4, %1 : vector<16x256xi32>
    %6 = arith.extui %5 : vector<16x256xi1> to vector<16x256xi32>
    %7 = arith.sitofp %6 : vector<16x256xi32> to vector<16x256xf32>
    %8 = arith.truncf %7 : vector<16x256xf32> to vector<16x256xbf16>
    %c0_1 = arith.constant 0 : index
    %c0_2 = arith.constant 0 : index
    %c0_3 = arith.constant 0 : index
    %9 = vector.load %arg2[%c0_1, %c0_2, %c0_3] : memref<2x256x128xbf16, #tpu.memory_space<vmem>>, vector<1x256x128xbf16>
    %10 = vector.shape_cast %9 : vector<1x256x128xbf16> to vector<256x128xbf16>
    %cst_4 = arith.constant dense<0.000000e+00> : vector<16x128xf32>
    %11 = tpu.matmul %8, %10, %cst_4 {dimension_numbers = #tpu.dot_dimension_numbers<[1], [0], [0], [1], [0, 0, 1, 1], [], []>} : vector<16x256xbf16>, vector<256x128xbf16>, vector<16x128xf32> -> vector<16x128xf32>
    %12 = arith.addf %2, %11 : vector<16x128xf32>
    %13 = vector.extract_strided_slice %0 {offsets = [0, 1], sizes = [16, 1], strides = [1, 1]} : vector<16x2xi32> to vector<16x1xi32>
    %14 = vector.broadcast %13 : vector<16x1xi32> to vector<16x256xi32>
    %15 = arith.cmpi eq, %14, %1 : vector<16x256xi32>
    %16 = arith.extui %15 : vector<16x256xi1> to vector<16x256xi32>
    %17 = arith.sitofp %16 : vector<16x256xi32> to vector<16x256xf32>
    %18 = arith.truncf %17 : vector<16x256xf32> to vector<16x256xbf16>
    %c1 = arith.constant 1 : index
    %c0_5 = arith.constant 0 : index
    %c0_6 = arith.constant 0 : index
    %19 = vector.load %arg2[%c1, %c0_5, %c0_6] : memref<2x256x128xbf16, #tpu.memory_space<vmem>>, vector<1x256x128xbf16>
    %20 = vector.shape_cast %19 : vector<1x256x128xbf16> to vector<256x128xbf16>
    %cst_7 = arith.constant dense<0.000000e+00> : vector<16x128xf32>
    %21 = tpu.matmul %18, %20, %cst_7 {dimension_numbers = #tpu.dot_dimension_numbers<[1], [0], [0], [1], [0, 0, 1, 1], [], []>} : vector<16x256xbf16>, vector<256x128xbf16>, vector<16x128xf32> -> vector<16x128xf32>
    %22 = arith.addf %12, %21 : vector<16x128xf32>
    %c0_8 = arith.constant 0 : index
    %c0_9 = arith.constant 0 : index
    %23 = vector.load %arg3[%c0_8, %c0_9] : memref<1x128xf32, #tpu.memory_space<vmem>>, vector<1x128xf32>
    %24 = vector.broadcast %23 : vector<1x128xf32> to vector<16x128xf32>
    %25 = arith.addf %22, %24 : vector<16x128xf32>
    %cst_10 = arith.constant 0.000000e+00 : f32
    %26 = vector.broadcast %cst_10 : f32 to vector<16x128xf32>
    %27 = arith.maximumf %25, %26 : vector<16x128xf32>
    %28 = arith.truncf %27 : vector<16x128xf32> to vector<16x128xbf16>
    %c0_11 = arith.constant 0 : index
    %c0_12 = arith.constant 0 : index
    %29 = vector.load %arg4[%c0_11, %c0_12] : memref<128x256xbf16, #tpu.memory_space<vmem>>, vector<128x256xbf16>
    %cst_13 = arith.constant dense<0.000000e+00> : vector<16x256xf32>
    %30 = tpu.matmul %28, %29, %cst_13 {dimension_numbers = #tpu.dot_dimension_numbers<[1], [0], [0], [1], [0, 0, 1, 1], [], []>} : vector<16x128xbf16>, vector<128x256xbf16>, vector<16x256xf32> -> vector<16x256xf32>
    %c0_14 = arith.constant 0 : index
    %c0_15 = arith.constant 0 : index
    %31 = vector.load %arg5[%c0_14, %c0_15] : memref<1x256xf32, #tpu.memory_space<vmem>>, vector<1x256xf32>
    %32 = vector.broadcast %31 : vector<1x256xf32> to vector<16x256xf32>
    %33 = arith.addf %30, %32 : vector<16x256xf32>
    %c0_16 = arith.constant 0 : index
    %c0_17 = arith.constant 0 : index
    %34 = vector.load %arg6[%c0_16, %c0_17] : memref<16x256xf32, #tpu.memory_space<vmem>>, vector<16x256xf32>
    tpu.vector_store %arg6[%c0_16, %c0_17], %33 {strides = array<i32>} : memref<16x256xf32, #tpu.memory_space<vmem>>, vector<16x256xf32>,
    return
  }
  func.func @transform_0(%arg0: i32) -> (i32, i32) {
    %c0_i32 = arith.constant 0 : i32
    %c0_i32_0 = arith.constant 0 : i32
    return %arg0, %c0_i32 : i32, i32
  }
  func.func @transform_1(%arg0: i32) -> (i32, i32, i32) {
    %c0_i32 = arith.constant 0 : i32
    %c0_i32_0 = arith.constant 0 : i32
    %c0_i32_1 = arith.constant 0 : i32
    %c0_i32_2 = arith.constant 0 : i32
    return %c0_i32, %c0_i32_0, %c0_i32_1 : i32, i32, i32
  }
  func.func @transform_2(%arg0: i32) -> (i32, i32) {
    %c0_i32 = arith.constant 0 : i32
    %c0_i32_0 = arith.constant 0 : i32
    %c0_i32_1 = arith.constant 0 : i32
    return %c0_i32, %c0_i32_0 : i32, i32
  }
  func.func @transform_3(%arg0: i32) -> (i32, i32) {
    %c0_i32 = arith.constant 0 : i32
    %c0_i32_0 = arith.constant 0 : i32
    %c0_i32_1 = arith.constant 0 : i32
    return %c0_i32, %c0_i32_0 : i32, i32
  }
  func.func @transform_4(%arg0: i32) -> (i32, i32) {
    %c0_i32 = arith.constant 0 : i32
    %c0_i32_0 = arith.constant 0 : i32
    %c0_i32_1 = arith.constant 0 : i32
    return %c0_i32, %c0_i32_0 : i32, i32
  }
  func.func @transform_5(%arg0: i32) -> (i32, i32) {
    %c0_i32 = arith.constant 0 : i32
    %c0_i32_0 = arith.constant 0 : i32
    return %arg0, %c0_i32 : i32, i32
  }
}

</mosaic_0001>

<llo_original>
// kernel: ngram_forward_packed.1
$region0: #{ngram_forward_packed.1}
  #allocation0 [shape = 'u32[]', space=smem, size = 0x4, offset = 0x4, fixed_abs, tag = 'smem constant byte address 0x4 - core index']
  #allocation1 [shape = 'u32[72,128]{1,0:T(1,128)}', space=vmem, size = 0x9000, scoped, tag = 'internal scratch']
  %s0 = inlined_call_operand.vmem [shape: s32[16,2], index: 0, kind: input, shape index: {}]
  %s1 = inlined_call_operand.hbm [shape: bf16[2,256,128], index: 1, kind: input, shape index: {}]
  %s2 = inlined_call_operand.vmem [shape: f32[1,128], index: 2, kind: input, shape index: {}]
  %s3 = inlined_call_operand.hbm [shape: bf16[128,256], index: 3, kind: input, shape index: {}]
  %s4 = inlined_call_operand.vmem [shape: f32[1,256], index: 4, kind: input, shape index: {}]
  %s5 = inlined_call_operand.vmem [shape: f32[16,256], index: 5, kind: output, shape index: {}]
  %s6 = sld [smem:[#allocation0]]
  $region38: #{ngram_forward_packed.1} parent=0
    _
  %s8 = ssub.s32 1, %s6
  %s9 = scalar_select 0, %s8, %s6
  $region1: #{ngram_forward_packed.1} parent=0
    #allocation2 [shape = 'u8[131072]{0}', space=vmem, size = 0x20000, scoped, tag = 'input window, operand 1, single buffered']
    #allocation3 [shape = 's32[1]{0}', space=sflag, size = 0x4, scoped, tag = 'scoped memory for ngram_forward_packed.1']
    #allocation4 [shape = 'u8[65536]{0}', space=vmem, size = 0x10000, scoped, tag = 'input window, operand 3, single buffered']
    #allocation5 [shape = 's32[1]{0}', space=sflag, size = 0x4, scoped, tag = 'scoped memory for ngram_forward_packed.1']
    %10 = vsyncpa [#allocation3], 0
    %11 = vsyncpa [#allocation5], 0
    // Predicated region
    $region2: #{ngram_forward_packed.1} parent=1 // pred_check
      _
    $region3: #{ngram_forward_packed.1} parent=1 // pred_check_branch
      %13 = sbr.rel (0) target = $region5
    $region4: #{ngram_forward_packed.1} parent=1 // pred_region
      _
    $region5: #{ngram_forward_packed.1} parent=1 // pred_fallthru
      _
    // Predicated region
    $region6: #{ngram_forward_packed.1} parent=1 // pred_check
      _
    $region7: #{ngram_forward_packed.1} parent=1 // pred_check_branch
      %15 = sbr.rel (0) target = $region9
    $region8: #{ngram_forward_packed.1} parent=1 // pred_region
      %17 = vsyncadd [#allocation3], 0
      %s18 = sshll.u32 %s1, 4
      %s19 = int_to_ptr.hbm [resolvable:$true] %s18
      %s20 = sshll.u32 [#allocation2], 4
      %s21 = int_to_ptr.vmem [resolvable:$true] %s20
      %26 = dma.hbm_to_vmem [thread:$0]  %s19, 4096, %s21, [#allocation3], 64, 64, 4
    $region9: #{ngram_forward_packed.1} parent=1 // pred_fallthru
      _
    // Predicated region
    $region10: #{ngram_forward_packed.1} parent=1 // pred_check
      _
    $region11: #{ngram_forward_packed.1} parent=1 // pred_check_branch
      %28 = sbr.rel (0) target = $region13
    $region12: #{ngram_forward_packed.1} parent=1 // pred_region
      _
    $region13: #{ngram_forward_packed.1} parent=1 // pred_fallthru
      _
    // Predicated region
    $region14: #{ngram_forward_packed.1} parent=1 // pred_check
      _
    $region15: #{ngram_forward_packed.1} parent=1 // pred_check_branch
      %30 = sbr.rel (0) target = $region17
    $region16: #{ngram_forward_packed.1} parent=1 // pred_region
      %32 = vsyncadd [#allocation5], 0
      %s33 = sshll.u32 %s3, 4
      %s34 = int_to_ptr.hbm [resolvable:$true] %s33
      %s35 = sshll.u32 [#allocation4], 4
      %s36 = int_to_ptr.vmem [resolvable:$true] %s35
      %41 = dma.hbm_to_vmem [thread:$0]  %s34, 2048, %s36, [#allocation5], 128, 128, 8
    $region17: #{ngram_forward_packed.1} parent=1 // pred_fallthru
      _
    // Predicated region
    $region18: #{ngram_forward_packed.1} parent=1 // pred_check
      _
    $region19: #{ngram_forward_packed.1} parent=1 // pred_check_branch
      %43 = sbr.rel (0) target = $region21
    $region20: #{ngram_forward_packed.1} parent=1 // pred_region
      _
    $region21: #{ngram_forward_packed.1} parent=1 // pred_fallthru
      _
    // Predicated region
    $region22: #{ngram_forward_packed.1} parent=1 // pred_check
      _
    $region23: #{ngram_forward_packed.1} parent=1 // pred_check_branch
      %45 = sbr.rel (0) target = $region25
    $region24: #{ngram_forward_packed.1} parent=1 // pred_region
      %47 = dma.done [#allocation3], 4096
    $region25: #{ngram_forward_packed.1} parent=1 // pred_fallthru
      _
    // Predicated region
    $region26: #{ngram_forward_packed.1} parent=1 // pred_check
      _
    $region27: #{ngram_forward_packed.1} parent=1 // pred_check_branch
      %49 = sbr.rel (0) target = $region29
    $region28: #{ngram_forward_packed.1} parent=1 // pred_region
      %51 = dma.done [#allocation5], 2048
    $region29: #{ngram_forward_packed.1} parent=1 // pred_fallthru
      _
    %v52 = vld [vmem:[%s0] sm:$0xff]
    %v53 = vld [vmem:[%s0 + $0x8] sm:$0xff]
    %v54 = vlaneseq
    %v55 = vand.u32 %v54, 127
    %v56 = vadd.s32 %v55, 128
    %57 = vset.pattern.permute.xlu0 0
    %58 = vperm.xlu0 %57, %v52
    %v59 = vpop.permute.xlu0 %58
    %60 = vset.pattern.permute.xlu0 0
    %61 = vperm.xlu0 %60, %v53
    %v62 = vpop.permute.xlu0 %61
    %vm63 = vcmp.eq.s32.totalorder %v59, %v55
    %vm64 = vcmp.eq.s32.totalorder %v59, %v56
    %vm65 = vcmp.eq.s32.totalorder %v62, %v55
    %vm66 = vcmp.eq.s32.totalorder %v62, %v56
    %v67 = vsel %vm63, 1, 0
    %v68 = vsel %vm64, 1, 0
    %v69 = vsel %vm65, 1, 0
    %v70 = vsel %vm66, 1, 0
    %v71 = vcvt.s32.f32 %v67
    %v72 = vcvt.s32.f32 %v68
    %v73 = vcvt.s32.f32 %v69
    %v74 = vcvt.s32.f32 %v70
    %v75 = vpack.c.bf16 %v73, %v71
    %v76 = vpack.c.bf16 %v74, %v72
    %v77 = vld [vmem:[#allocation2] sm:$0xf]
    %v78 = vld [vmem:[#allocation2 + $0x4] sm:$0xf]
    %v79 = vld [vmem:[#allocation2 + $0x8] sm:$0xf]
    %v80 = vld [vmem:[#allocation2 + $0xc] sm:$0xf]
    %v81 = vld [vmem:[#allocation2 + $0x10] sm:$0xf]
    %v82 = vld [vmem:[#allocation2 + $0x14] sm:$0xf]
    %v83 = vld [vmem:[#allocation2 + $0x18] sm:$0xf]
    %v84 = vld [vmem:[#allocation2 + $0x1c] sm:$0xf]
    %v85 = vld [vmem:[#allocation2 + $0x20] sm:$0xf]
    %v86 = vld [vmem:[#allocation2 + $0x24] sm:$0xf]
    %v87 = vld [vmem:[#allocation2 + $0x28] sm:$0xf]
    %v88 = vld [vmem:[#allocation2 + $0x2c] sm:$0xf]
    %v89 = vld [vmem:[#allocation2 + $0x30] sm:$0xf]
    %v90 = vld [vmem:[#allocation2 + $0x34] sm:$0xf]
    %v91 = vld [vmem:[#allocation2 + $0x38] sm:$0xf]
    %v92 = vld [vmem:[#allocation2 + $0x3c] sm:$0xf]
    %v93 = vld [vmem:[#allocation2 + $0x40] sm:$0xf]
    %v94 = vld [vmem:[#allocation2 + $0x44] sm:$0xf]
    %v95 = vld [vmem:[#allocation2 + $0x48] sm:$0xf]
    %v96 = vld [vmem:[#allocation2 + $0x4c] sm:$0xf]
    %v97 = vld [vmem:[#allocation2 + $0x50] sm:$0xf]
    %v98 = vld [vmem:[#allocation2 + $0x54] sm:$0xf]
    %v99 = vld [vmem:[#allocation2 + $0x58] sm:$0xf]
    %v100 = vld [vmem:[#allocation2 + $0x5c] sm:$0xf]
    %v101 = vld [vmem:[#allocation2 + $0x60] sm:$0xf]
    %v102 = vld [vmem:[#allocation2 + $0x64] sm:$0xf]
    %v103 = vld [vmem:[#allocation2 + $0x68] sm:$0xf]
    %v104 = vld [vmem:[#allocation2 + $0x6c] sm:$0xf]
    %v105 = vld [vmem:[#allocation2 + $0x70] sm:$0xf]
    %v106 = vld [vmem:[#allocation2 + $0x74] sm:$0xf]
    %v107 = vld [vmem:[#allocation2 + $0x78] sm:$0xf]
    %v108 = vld [vmem:[#allocation2 + $0x7c] sm:$0xf]
    %109 = vset.pattern.permute.xlu0 1
    %110 = vperm.xlu0 %109, %v52
    %v111 = vpop.permute.xlu0 %110
    %112 = vset.pattern.permute.xlu0 1
    %113 = vperm.xlu0 %112, %v53
    %v114 = vpop.permute.xlu0 %113
    %vm115 = vcmp.eq.s32.totalorder %v111, %v55
    %vm116 = vcmp.eq.s32.totalorder %v111, %v56
    %vm117 = vcmp.eq.s32.totalorder %v114, %v55
    %vm118 = vcmp.eq.s32.totalorder %v114, %v56
    %v119 = vsel %vm115, 1, 0
    %v120 = vsel %vm116, 1, 0
    %v121 = vsel %vm117, 1, 0
    %v122 = vsel %vm118, 1, 0
    %v123 = vcvt.s32.f32 %v119
    %v124 = vcvt.s32.f32 %v120
    %v125 = vcvt.s32.f32 %v121
    %v126 = vcvt.s32.f32 %v122
    %v127 = vpack.c.bf16 %v125, %v123
    %v128 = vpack.c.bf16 %v126, %v124
    %s129 = scalar_lea.vmem [#allocation2], 128
    %v130 = vld [vmem:[%s129] sm:$0xf]
    %v131 = vld [vmem:[%s129 + $0x4] sm:$0xf]
    %v132 = vld [vmem:[%s129 + $0x8] sm:$0xf]
    %v133 = vld [vmem:[%s129 + $0xc] sm:$0xf]
    %v134 = vld [vmem:[%s129 + $0x10] sm:$0xf]
    %v135 = vld [vmem:[%s129 + $0x14] sm:$0xf]
    %v136 = vld [vmem:[%s129 + $0x18] sm:$0xf]
    %v137 = vld [vmem:[%s129 + $0x1c] sm:$0xf]
    %v138 = vld [vmem:[%s129 + $0x20] sm:$0xf]
    %v139 = vld [vmem:[%s129 + $0x24] sm:$0xf]
    %v140 = vld [vmem:[%s129 + $0x28] sm:$0xf]
    %v141 = vld [vmem:[%s129 + $0x2c] sm:$0xf]
    %v142 = vld [vmem:[%s129 + $0x30] sm:$0xf]
    %v143 = vld [vmem:[%s129 + $0x34] sm:$0xf]
    %v144 = vld [vmem:[%s129 + $0x38] sm:$0xf]
    %v145 = vld [vmem:[%s129 + $0x3c] sm:$0xf]
    %v146 = vld [vmem:[%s129 + $0x40] sm:$0xf]
    %v147 = vld [vmem:[%s129 + $0x44] sm:$0xf]
    %v148 = vld [vmem:[%s129 + $0x48] sm:$0xf]
    %v149 = vld [vmem:[%s129 + $0x4c] sm:$0xf]
    %v150 = vld [vmem:[%s129 + $0x50] sm:$0xf]
    %v151 = vld [vmem:[%s129 + $0x54] sm:$0xf]
    %v152 = vld [vmem:[%s129 + $0x58] sm:$0xf]
    %v153 = vld [vmem:[%s129 + $0x5c] sm:$0xf]
    %v154 = vld [vmem:[%s129 + $0x60] sm:$0xf]
    %v155 = vld [vmem:[%s129 + $0x64] sm:$0xf]
    %v156 = vld [vmem:[%s129 + $0x68] sm:$0xf]
    %v157 = vld [vmem:[%s129 + $0x6c] sm:$0xf]
    %v158 = vld [vmem:[%s129 + $0x70] sm:$0xf]
    %v159 = vld [vmem:[%s129 + $0x74] sm:$0xf]
    %v160 = vld [vmem:[%s129 + $0x78] sm:$0xf]
    %v161 = vld [vmem:[%s129 + $0x7c] sm:$0xf]
    %v194 = vunpack.c.l.b16 %v130
    %v195 = vunpack.c.l.b16 %v131
    %v196 = vunpack.c.l.b16 %v132
    %v197 = vunpack.c.l.b16 %v133
    %v198 = vunpack.c.l.b16 %v134
    %v199 = vunpack.c.l.b16 %v135
    %v200 = vunpack.c.l.b16 %v136
    %v201 = vunpack.c.l.b16 %v137
    %v202 = vunpack.c.l.b16 %v138
    %v203 = vunpack.c.l.b16 %v139
    %v204 = vunpack.c.l.b16 %v140
    %v205 = vunpack.c.l.b16 %v141
    %v206 = vunpack.c.l.b16 %v142
    %v207 = vunpack.c.l.b16 %v143
    %v208 = vunpack.c.l.b16 %v144
    %v209 = vunpack.c.l.b16 %v145
    %v210 = vunpack.c.l.b16 %v146
    %v211 = vunpack.c.l.b16 %v147
    %v212 = vunpack.c.l.b16 %v148
    %v213 = vunpack.c.l.b16 %v149
    %v214 = vunpack.c.l.b16 %v150
    %v215 = vunpack.c.l.b16 %v151
    %v216 = vunpack.c.l.b16 %v152
    %v217 = vunpack.c.l.b16 %v153
    %v218 = vunpack.c.l.b16 %v154
    %v219 = vunpack.c.l.b16 %v155
    %v220 = vunpack.c.l.b16 %v156
    %v221 = vunpack.c.l.b16 %v157
    %v222 = vunpack.c.l.b16 %v158
    %v223 = vunpack.c.l.b16 %v159
    %v224 = vunpack.c.l.b16 %v160
    %v225 = vunpack.c.l.b16 %v161
    %v226 = vpack.c.b16 %v195, %v194
    %v227 = vpack.c.b16 %v197, %v196
    %v228 = vpack.c.b16 %v199, %v198
    %v229 = vpack.c.b16 %v201, %v200
    %v230 = vpack.c.b16 %v203, %v202
    %v231 = vpack.c.b16 %v205, %v204
    %v232 = vpack.c.b16 %v207, %v206
    %v233 = vpack.c.b16 %v209, %v208
    %v234 = vpack.c.b16 %v211, %v210
    %v235 = vpack.c.b16 %v213, %v212
    %v236 = vpack.c.b16 %v215, %v214
    %v237 = vpack.c.b16 %v217, %v216
    %v238 = vpack.c.b16 %v219, %v218
    %v239 = vpack.c.b16 %v221, %v220
    %v240 = vpack.c.b16 %v223, %v222
    %v241 = vpack.c.b16 %v225, %v224
    %258 = vmatpush.bf16.msra.mxu0 %v233
    %259 = vmatpush.bf16.msra.mxu0 %v232
    %260 = vmatpush.bf16.msra.mxu0 %v231
    %261 = vmatpush.bf16.msra.mxu0 %v230
    %262 = vmatpush.bf16.msra.mxu0 %v229
    %263 = vmatpush.bf16.msra.mxu0 %v228
    %264 = vmatpush.bf16.msra.mxu0 %v227
    %265 = vmatpush.bf16.msra.mxu0 %v226
    %266 = vmatmul.bf16.gmra.mxu0 %v127
    %v267 = vpop.f32.mrf.mxu0
    %v268 = vadd.f32 0.0, %v267
    %v269 = vpop.f32.mrf.mxu0
    %v270 = vadd.f32 0.0, %v269
    %271 = vdwg.mxu0
    %272 = vmatpush.bf16.msra.mxu0 %v241
    %273 = vmatpush.bf16.msra.mxu0 %v240
    %274 = vmatpush.bf16.msra.mxu0 %v239
    %275 = vmatpush.bf16.msra.mxu0 %v238
    %276 = vmatpush.bf16.msra.mxu0 %v237
    %277 = vmatpush.bf16.msra.mxu0 %v236
    %278 = vmatpush.bf16.msra.mxu0 %v235
    %279 = vmatpush.bf16.msra.mxu0 %v234
    %280 = vmatmul.bf16.gmra.mxu0 %v128
    %v281 = vpop.f32.mrf.mxu0
    %v282 = vadd.f32 %v268, %v281
    %v283 = vpop.f32.mrf.mxu0
    %v284 = vadd.f32 %v270, %v283
    %285 = vdwg.mxu0
    %v318 = vunpack.c.l.b16 %v77
    %v319 = vunpack.c.l.b16 %v78
    %v320 = vunpack.c.l.b16 %v79
    %v321 = vunpack.c.l.b16 %v80
    %v322 = vunpack.c.l.b16 %v81
    %v323 = vunpack.c.l.b16 %v82
    %v324 = vunpack.c.l.b16 %v83
    %v325 = vunpack.c.l.b16 %v84
    %v326 = vunpack.c.l.b16 %v85
    %v327 = vunpack.c.l.b16 %v86
    %v328 = vunpack.c.l.b16 %v87
    %v329 = vunpack.c.l.b16 %v88
    %v330 = vunpack.c.l.b16 %v89
    %v331 = vunpack.c.l.b16 %v90
    %v332 = vunpack.c.l.b16 %v91
    %v333 = vunpack.c.l.b16 %v92
    %v334 = vunpack.c.l.b16 %v93
    %v335 = vunpack.c.l.b16 %v94
    %v336 = vunpack.c.l.b16 %v95
    %v337 = vunpack.c.l.b16 %v96
    %v338 = vunpack.c.l.b16 %v97
    %v339 = vunpack.c.l.b16 %v98
    %v340 = vunpack.c.l.b16 %v99
    %v341 = vunpack.c.l.b16 %v100
    %v342 = vunpack.c.l.b16 %v101
    %v343 = vunpack.c.l.b16 %v102
    %v344 = vunpack.c.l.b16 %v103
    %v345 = vunpack.c.l.b16 %v104
    %v346 = vunpack.c.l.b16 %v105
    %v347 = vunpack.c.l.b16 %v106
    %v348 = vunpack.c.l.b16 %v107
    %v349 = vunpack.c.l.b16 %v108
    %v350 = vpack.c.b16 %v319, %v318
    %v351 = vpack.c.b16 %v321, %v320
    %v352 = vpack.c.b16 %v323, %v322
    %v353 = vpack.c.b16 %v325, %v324
    %v354 = vpack.c.b16 %v327, %v326
    %v355 = vpack.c.b16 %v329, %v328
    %v356 = vpack.c.b16 %v331, %v330
    %v357 = vpack.c.b16 %v333, %v332
    %v358 = vpack.c.b16 %v335, %v334
    %v359 = vpack.c.b16 %v337, %v336
    %v360 = vpack.c.b16 %v339, %v338
    %v361 = vpack.c.b16 %v341, %v340
    %v362 = vpack.c.b16 %v343, %v342
    %v363 = vpack.c.b16 %v345, %v344
    %v364 = vpack.c.b16 %v347, %v346
    %v365 = vpack.c.b16 %v349, %v348
    %382 = vmatpush.bf16.msra.mxu0 %v357
    %383 = vmatpush.bf16.msra.mxu0 %v356
    %384 = vmatpush.bf16.msra.mxu0 %v355
    %385 = vmatpush.bf16.msra.mxu0 %v354
    %386 = vmatpush.bf16.msra.mxu0 %v353
    %387 = vmatpush.bf16.msra.mxu0 %v352
    %388 = vmatpush.bf16.msra.mxu0 %v351
    %389 = vmatpush.bf16.msra.mxu0 %v350
    %390 = vmatmul.bf16.gmra.mxu0 %v75
    %v391 = vpop.f32.mrf.mxu0
    %v392 = vadd.f32 %v282, %v391
    %v393 = vpop.f32.mrf.mxu0
    %v394 = vadd.f32 %v284, %v393
    %395 = vdwg.mxu0
    %396 = vmatpush.bf16.msra.mxu0 %v365
    %397 = vmatpush.bf16.msra.mxu0 %v364
    %398 = vmatpush.bf16.msra.mxu0 %v363
    %399 = vmatpush.bf16.msra.mxu0 %v362
    %400 = vmatpush.bf16.msra.mxu0 %v361
    %401 = vmatpush.bf16.msra.mxu0 %v360
    %402 = vmatpush.bf16.msra.mxu0 %v359
    %403 = vmatpush.bf16.msra.mxu0 %v358
    %404 = vmatmul.bf16.gmra.mxu0 %v76
    %v405 = vpop.f32.mrf.mxu0
    %v406 = vadd.f32 %v392, %v405
    %v407 = vpop.f32.mrf.mxu0
    %v408 = vadd.f32 %v394, %v407
    %409 = vdwg.mxu0
    %v410 = vld [vmem:[%s2] sm:$0x1]
    %v412 = vperm.slane %v410, 0
    %v414 = vadd.f32 %v406, %v412
    %v415 = vadd.f32 %v408, %v412
    %v416 = vmax.f32 %v414, 0.0
    %v417 = vmax.f32 %v415, 0.0
    %v418 = vpack.c.bf16 %v417, %v416
    %v419 = vld [vmem:[#allocation4] sm:$0xff]
    %v420 = vld [vmem:[#allocation4 + $0x8] sm:$0xff]
    %v421 = vld [vmem:[#allocation4 + $0x10] sm:$0xff]
    %v422 = vld [vmem:[#allocation4 + $0x18] sm:$0xff]
    %v423 = vld [vmem:[#allocation4 + $0x20] sm:$0xff]
    %v424 = vld [vmem:[#allocation4 + $0x28] sm:$0xff]
    %v425 = vld [vmem:[#allocation4 + $0x30] sm:$0xff]
    %v426 = vld [vmem:[#allocation4 + $0x38] sm:$0xff]
    %v427 = vld [vmem:[#allocation4 + $0x40] sm:$0xff]
    %v428 = vld [vmem:[#allocation4 + $0x48] sm:$0xff]
    %v429 = vld [vmem:[#allocation4 + $0x50] sm:$0xff]
    %v430 = vld [vmem:[#allocation4 + $0x58] sm:$0xff]
    %v431 = vld [vmem:[#allocation4 + $0x60] sm:$0xff]
    %v432 = vld [vmem:[#allocation4 + $0x68] sm:$0xff]
    %v433 = vld [vmem:[#allocation4 + $0x70] sm:$0xff]
    %v434 = vld [vmem:[#allocation4 + $0x78] sm:$0xff]
    %v435 = vld [vmem:[%s4] sm:$0x3]
    %v437 = vperm.slane %v435, 0
    %v438 = vperm.slane %v435, 1
    %v457 = vunpack.c.l.b16 %v419
    %v458 = vunpack.c.h.b16 %v419
    %v459 = vunpack.c.l.b16 %v420
    %v460 = vunpack.c.h.b16 %v420
    %v461 = vunpack.c.l.b16 %v421
    %v462 = vunpack.c.h.b16 %v421
    %v463 = vunpack.c.l.b16 %v422
    %v464 = vunpack.c.h.b16 %v422
    %v465 = vunpack.c.l.b16 %v423
    %v466 = vunpack.c.h.b16 %v423
    %v467 = vunpack.c.l.b16 %v424
    %v468 = vunpack.c.h.b16 %v424
    %v469 = vunpack.c.l.b16 %v425
    %v470 = vunpack.c.h.b16 %v425
    %v471 = vunpack.c.l.b16 %v426
    %v472 = vunpack.c.h.b16 %v426
    %v473 = vunpack.c.l.b16 %v427
    %v474 = vunpack.c.h.b16 %v427
    %v475 = vunpack.c.l.b16 %v428
    %v476 = vunpack.c.h.b16 %v428
    %v477 = vunpack.c.l.b16 %v429
    %v478 = vunpack.c.h.b16 %v429
    %v479 = vunpack.c.l.b16 %v430
    %v480 = vunpack.c.h.b16 %v430
    %v481 = vunpack.c.l.b16 %v431
    %v482 = vunpack.c.h.b16 %v431
    %v483 = vunpack.c.l.b16 %v432
    %v484 = vunpack.c.h.b16 %v432
    %v485 = vunpack.c.l.b16 %v433
    %v486 = vunpack.c.h.b16 %v433
    %v487 = vunpack.c.l.b16 %v434
    %v488 = vunpack.c.h.b16 %v434
    %v489 = vpack.c.b16 %v459, %v457
    %v490 = vpack.c.b16 %v460, %v458
    %v491 = vpack.c.b16 %v463, %v461
    %v492 = vpack.c.b16 %v464, %v462
    %v493 = vpack.c.b16 %v467, %v465
    %v494 = vpack.c.b16 %v468, %v466
    %v495 = vpack.c.b16 %v471, %v469
    %v496 = vpack.c.b16 %v472, %v470
    %v497 = vpack.c.b16 %v475, %v473
    %v498 = vpack.c.b16 %v476, %v474
    %v499 = vpack.c.b16 %v479, %v477
    %v500 = vpack.c.b16 %v480, %v478
    %v501 = vpack.c.b16 %v483, %v481
    %v502 = vpack.c.b16 %v484, %v482
    %v503 = vpack.c.b16 %v487, %v485
    %v504 = vpack.c.b16 %v488, %v486
    %521 = vmatpush.bf16.msra.mxu0 %v503
    %522 = vmatpush.bf16.msra.mxu0 %v501
    %523 = vmatpush.bf16.msra.mxu0 %v499
    %524 = vmatpush.bf16.msra.mxu0 %v497
    %525 = vmatpush.bf16.msra.mxu0 %v495
    %526 = vmatpush.bf16.msra.mxu0 %v493
    %527 = vmatpush.bf16.msra.mxu0 %v491
    %528 = vmatpush.bf16.msra.mxu0 %v489
    %529 = vmatmul.bf16.gmra.mxu0 %v418
    %v530 = vpop.f32.mrf.mxu0
    %v531 = vadd.f32 %v437, %v530
    %v532 = vpop.f32.mrf.mxu0
    %v533 = vadd.f32 %v437, %v532
    %534 = vdwg.mxu0
    %535 = vmatpush.bf16.msra.mxu0 %v504
    %536 = vmatpush.bf16.msra.mxu0 %v502
    %537 = vmatpush.bf16.msra.mxu0 %v500
    %538 = vmatpush.bf16.msra.mxu0 %v498
    %539 = vmatpush.bf16.msra.mxu0 %v496
    %540 = vmatpush.bf16.msra.mxu0 %v494
    %541 = vmatpush.bf16.msra.mxu0 %v492
    %542 = vmatpush.bf16.msra.mxu0 %v490
    %543 = vmatmul.bf16.gmra.mxu0 %v418
    %v544 = vpop.f32.mrf.mxu0
    %v545 = vadd.f32 %v438, %v544
    %v546 = vpop.f32.mrf.mxu0
    %v547 = vadd.f32 %v438, %v546
    %548 = vdwg.mxu0
    %549 = vst [vmem:[%s5] sm:$0xff] %v531
    %550 = vst [vmem:[%s5 + $0x8] sm:$0xff] %v545
    %551 = vst [vmem:[%s5 + $0x10] sm:$0xff] %v533
    %552 = vst [vmem:[%s5 + $0x18] sm:$0xff] %v547
    // Predicated region
    $region30: #{ngram_forward_packed.1} parent=1 // pred_check
      _
    $region31: #{ngram_forward_packed.1} parent=1 // pred_check_branch
      %554 = sbr.rel (0) target = $region33
    $region32: #{ngram_forward_packed.1} parent=1 // pred_region
      _
    $region33: #{ngram_forward_packed.1} parent=1 // pred_fallthru
      _
    // Predicated region
    $region34: #{ngram_forward_packed.1} parent=1 // pred_check
      _
    $region35: #{ngram_forward_packed.1} parent=1 // pred_check_branch
      %556 = sbr.rel (0) target = $region37
    $region36: #{ngram_forward_packed.1} parent=1 // pred_region
      _
    $region37: #{ngram_forward_packed.1} parent=1 // pred_fallthru
      _
    %557 = vsyncpa [#allocation3], 1
    %558 = vsyncpa [#allocation5], 1

</llo_original>
